<compile_context>
chip_gen: v7x
topology: tpu7x:2x2x1
jax: 0.10.0
libtpu: 0.0.40
codegen_flags: <defaults>
</compile_context>

<pallas_src>
import functools

import jax
import jax.numpy as jnp
from jax.experimental import pallas as pl
from jax.experimental.pallas import tpu as pltpu


def _round_up(x, m):
    return ((x + m - 1) // m) * m


def _cdiv(a, b):
    return (a + b - 1) // b


def _ava_logits_kernel(x_ref, w1_ref, b1_ref, w2_ref, b2_ref, out_ref):
    # x arrives f32 straight from HBM; cast to bf16 here (VPU) instead of a
    # separate XLA convert pass over HBM in the wrapper.
    xb = x_ref[...].astype(jnp.bfloat16)
    # Hidden layer: bf16 @ bf16 on the MXU, f32 accumulation, f32 bias add.
    h = jnp.dot(xb, w1_ref[...], preferred_element_type=jnp.float32) + b1_ref[...]
    # LeakyReLU, negative_slope = 0.01 (PyTorch default). f32 VPU select.
    h = jnp.where(h >= 0.0, h, 0.01 * h)
    # TODO(synk): nn.Dropout(p=0.6) is implemented as eval-mode identity only;
    # training-mode dropout (pltpu.prng_seed + random mask) is not implemented.
    # Output layer: cast hidden to bf16 for an MXU-native matmul, f32 accumulate
    # + bias, then store a lane-dense (tb, n_pad) slab with unmasked stores.
    logit = jnp.dot(h.astype(w2_ref.dtype), w2_ref[...],
                    preferred_element_type=jnp.float32) + b2_ref[...]
    out_ref[...] = logit.astype(out_ref.dtype)


@functools.partial(jax.jit, static_argnames=("n_way", "block_b", "out_dtype"))
def ava_head_forward(embs, params, *, n_way, block_b=512, out_dtype=jnp.float32):
    """Runs the AVAHead forward pass. Returns (logit, 0.0, 0.0)."""
    w1 = params["logits_w1"]   # bf16 [in_dim, feat_dim]
    b1 = params["logits_b1"]   # f32  [1, feat_dim]
    w2 = params["logits_w2"]   # bf16 [feat_dim, n_pad]  (lane-padded at init)
    b2 = params["logits_b2"]   # f32  [1, n_pad]

    B, in_dim = embs.shape
    feat_dim = w1.shape[1]
    n_pad = w2.shape[1]
    assert n_way <= n_pad

    # --- Batch tiling ---------------------------------------------------------
    # tb is a multiple of 8 sublanes, capped at ~B/4 so v7x's two TensorCores
    # each get >=2 tiles when B allows; no batch padding (ragged last tile).
    tb_cap = max(8, _round_up(_cdiv(B, 4), 8))
    tb = min(_round_up(block_b, 8), tb_cap, _round_up(B, 8))
    grid = (_cdiv(B, tb),)

    # --- Explicit VMEM budget (valid for v5e/v6e 128 MiB and v7x 64 MiB) ------
    out_isize = jnp.dtype(out_dtype).itemsize
    weight_vmem = (in_dim * feat_dim * 2 + feat_dim * 4      # w1 bf16 + b1 f32 (1x buffered)
                   + feat_dim * n_pad * 2 + n_pad * 4)       # w2 bf16 + b2 f32 (1x buffered)
    io_vmem = 2 * tb * (in_dim * 4 + n_pad * out_isize)      # 2x-buffered x / out tiles
    interm_vmem = tb * (feat_dim * 6 + in_dim * 2)           # f32 hidden + bf16 temporaries
    vmem_limit = int(min(max(2 * (weight_vmem + io_vmem + interm_vmem), 16 << 20),
                         64 << 20))

    const_map = lambda i: (0, 0)
    out_padded = pl.pallas_call(
        _ava_logits_kernel,
        out_shape=jax.ShapeDtypeStruct((B, n_pad), out_dtype),
        grid_spec=pltpu.PrefetchScalarGridSpec(
            num_scalar_prefetch=0,
            grid=grid,
            in_specs=[
                # x is tiled over the batch axis (default 2-deep pipeline).
                pl.BlockSpec((tb, in_dim), lambda i: (i, 0)),
                # Weights/biases: constant index map + single buffer -> DMAed
                # once, stay VMEM-resident, half the VMEM of double-buffering.
                pl.BlockSpec((in_dim, feat_dim), const_map,
                             pipeline_mode=pl.Buffered(1)),
                pl.BlockSpec((1, feat_dim), const_map,
                             pipeline_mode=pl.Buffered(1)),
                pl.BlockSpec((feat_dim, n_pad), const_map,
                             pipeline_mode=pl.Buffered(1)),
                pl.BlockSpec((1, n_pad), const_map,
                             pipeline_mode=pl.Buffered(1)),
            ],
            out_specs=pl.BlockSpec((tb, n_pad), lambda i: (i, 0)),
        ),
        compiler_params=pltpu.CompilerParams(
            # Independent batch tiles -> shard across TCs on v7x megacore.
            dimension_semantics=("parallel",),
            vmem_limit_bytes=vmem_limit),
    )(embs, w1, b1, w2, b2)

    # Lane-pad slice stays inside this jit (fusable with the consumer) and is
    # skipped entirely when n_way is already a multiple of 128.
    logit = out_padded if n_pad == n_way else out_padded[:, :n_way]
    return logit, 0.0, 0.0


def init_ava_head_params(key, in_dim, n_way, latent_dim=128, feat_dim=1024):
    """Deterministic synthetic parameter init mirroring the module's shapes.

    Weights are stored pre-transposed as [fan_in, fan_out] (vs. PyTorch's
    [out, in]) in bf16 for MXU-native matmuls; biases stay f32.  The logits
    output layer (w2/b2) is zero-padded ONCE here to a multiple of 128 lanes so
    the kernel writes an unmasked lane-dense output slab with no per-call pad.
    """
    ks = jax.random.split(key, 8)

    def linear(kw, kb, fan_in, fan_out, pad_to=None):
        bound = 1.0 / jnp.sqrt(jnp.float32(fan_in))
        w = jax.random.uniform(kw, (fan_in, fan_out), jnp.float32, -bound, bound)
        b = jax.random.uniform(kb, (1, fan_out), jnp.float32, -bound, bound)
        if pad_to is not None and pad_to != fan_out:
            w = jnp.pad(w, ((0, 0), (0, pad_to - fan_out)))
            b = jnp.pad(b, ((0, 0), (0, pad_to - fan_out)))
        return w.astype(jnp.bfloat16), b

    n_pad = _round_up(n_way, 128)
    # logits branch (used by forward)
    lw1, lb1 = linear(ks[0], ks[1], in_dim, feat_dim)
    lw2, lb2 = linear(ks[2], ks[3], feat_dim, n_way, pad_to=n_pad)
    # projector branch (initialized for shape parity; unused in forward)
    pw1, pb1 = linear(ks[4], ks[5], in_dim, feat_dim)
    pw2, pb2 = linear(ks[6], ks[7], feat_dim, 2 * latent_dim)

    return {
        "logits_w1": lw1, "logits_b1": lb1,
        "logits_w2": lw2, "logits_b2": lb2,
        "proj_w1": pw1, "proj_b1": pb1,
        "proj_w2": pw2, "proj_b2": pb2,
    }


if __name__ == "__main__":
    # Small shapes consistent with the module: batch=8, in_dim=32,
    # feat_dim=128, latent_dim=16, n_way=8.
    B, in_dim, feat_dim, latent_dim, n_way = 8, 32, 128, 16, 8

    key = jax.random.PRNGKey(0)
    k_emb, k_params = jax.random.split(key)
    embs = jax.random.normal(k_emb, (B, in_dim), jnp.float32)
    params = init_ava_head_params(k_params, in_dim, n_way,
                                  latent_dim=latent_dim, feat_dim=feat_dim)

    logit, aux0, aux1 = ava_head_forward(embs, params, n_way=n_way)
    logit = jax.block_until_ready(logit)

    # Reference check in plain JAX mirroring the kernel's precision choices
    # (bf16 MXU operands, f32 accumulation; eval-mode dropout == identity).
    xf = embs.astype(jnp.bfloat16).astype(jnp.float32)
    w1f = params["logits_w1"].astype(jnp.float32)
    w2f = params["logits_w2"][:, :n_way].astype(jnp.float32)
    b2f = params["logits_b2"][:, :n_way]
    h_ref = xf @ w1f + params["logits_b1"]
    h_ref = jnp.where(h_ref >= 0.0, h_ref, 0.01 * h_ref)
    logit_ref = h_ref.astype(jnp.bfloat16).astype(jnp.float32) @ w2f + b2f

    assert logit.shape == (B, n_way)
    assert aux0 == 0.0 and aux1 == 0.0
    assert jnp.allclose(logit, logit_ref, atol=1e-2, rtol=1e-2), (
        jnp.max(jnp.abs(logit - logit_ref)))

    print("KERNEL_OK")
</pallas_src>

<mosaic_0001>
module attributes {stable_mosaic.version = 11 : i64} {
  func.func @_ava_logits_kernel(%arg0: i32, %arg1: memref<8x32xf32, #tpu.memory_space<vmem>>, %arg2: memref<32x128xbf16, #tpu.memory_space<vmem>>, %arg3: memref<1x128xf32, #tpu.memory_space<vmem>>, %arg4: memref<128x128xbf16, #tpu.memory_space<vmem>>, %arg5: memref<1x128xf32, #tpu.memory_space<vmem>>, %arg6: memref<8x128xf32, #tpu.memory_space<vmem>>) attributes {dimension_semantics = [#tpu.dimension_semantics<parallel>], iteration_bounds = array<i64: 1>, scalar_prefetch = 0 : i64, scratch_operands = 0 : i64, tpu.core_type = #tpu.core_type<tc>, window_params = [{transform_indices = @transform_0, window_bounds = array<i64: 8, 32>}, {pipeline_mode = #tpu.pipeline_mode<synchronous>, transform_indices = @transform_1, window_bounds = array<i64: 32, 128>}, {pipeline_mode = #tpu.pipeline_mode<synchronous>, transform_indices = @transform_2, window_bounds = array<i64: 1, 128>}, {pipeline_mode = #tpu.pipeline_mode<synchronous>, transform_indices = @transform_3, window_bounds = array<i64: 128, 128>}, {pipeline_mode = #tpu.pipeline_mode<synchronous>, transform_indices = @transform_4, window_bounds = array<i64: 1, 128>}, {transform_indices = @transform_5, window_bounds = array<i64: 8, 128>}]} {
    %c0 = arith.constant 0 : index
    %c0_0 = arith.constant 0 : index
    %0 = vector.load %arg1[%c0, %c0_0] : memref<8x32xf32, #tpu.memory_space<vmem>>, vector<8x32xf32>
    %1 = arith.truncf %0 : vector<8x32xf32> to vector<8x32xbf16>
    %c0_1 = arith.constant 0 : index
    %c0_2 = arith.constant 0 : index
    %2 = vector.load %arg2[%c0_1, %c0_2] : memref<32x128xbf16, #tpu.memory_space<vmem>>, vector<32x128xbf16>
    %cst = arith.constant dense<0.000000e+00> : vector<8x128xf32>
    %3 = tpu.matmul %1, %2, %cst {dimension_numbers = #tpu.dot_dimension_numbers<[1], [0], [0], [1], [0, 0, 1, 1], [], []>} : vector<8x32xbf16>, vector<32x128xbf16>, vector<8x128xf32> -> vector<8x128xf32>
    %c0_3 = arith.constant 0 : index
    %c0_4 = arith.constant 0 : index
    %4 = vector.load %arg3[%c0_3, %c0_4] : memref<1x128xf32, #tpu.memory_space<vmem>>, vector<1x128xf32>
    %5 = vector.broadcast %4 : vector<1x128xf32> to vector<8x128xf32>
    %6 = arith.addf %3, %5 : vector<8x128xf32>
    %cst_5 = arith.constant 0.000000e+00 : f32
    %7 = vector.broadcast %cst_5 : f32 to vector<8x128xf32>
    %8 = arith.cmpf oge, %6, %7 : vector<8x128xf32>
    %cst_6 = arith.constant 0.00999999977 : f32
    %9 = vector.broadcast %cst_6 : f32 to vector<8x128xf32>
    %10 = arith.mulf %9, %6 : vector<8x128xf32>
    %11 = arith.select %8, %6, %10 : vector<8x128xi1>, vector<8x128xf32>
    %12 = arith.truncf %11 : vector<8x128xf32> to vector<8x128xbf16>
    %c0_7 = arith.constant 0 : index
    %c0_8 = arith.constant 0 : index
    %13 = vector.load %arg4[%c0_7, %c0_8] : memref<128x128xbf16, #tpu.memory_space<vmem>>, vector<128x128xbf16>
    %cst_9 = arith.constant dense<0.000000e+00> : vector<8x128xf32>
    %14 = tpu.matmul %12, %13, %cst_9 {dimension_numbers = #tpu.dot_dimension_numbers<[1], [0], [0], [1], [0, 0, 1, 1], [], []>} : vector<8x128xbf16>, vector<128x128xbf16>, vector<8x128xf32> -> vector<8x128xf32>
    %c0_10 = arith.constant 0 : index
    %c0_11 = arith.constant 0 : index
    %15 = vector.load %arg5[%c0_10, %c0_11] : memref<1x128xf32, #tpu.memory_space<vmem>>, vector<1x128xf32>
    %16 = vector.broadcast %15 : vector<1x128xf32> to vector<8x128xf32>
    %17 = arith.addf %14, %16 : vector<8x128xf32>
    %c0_12 = arith.constant 0 : index
    %c0_13 = arith.constant 0 : index
    %18 = vector.load %arg6[%c0_12, %c0_13] : memref<8x128xf32, #tpu.memory_space<vmem>>, vector<8x128xf32>
    tpu.vector_store %arg6[%c0_12, %c0_13], %17 {strides = array<i32>} : memref<8x128xf32, #tpu.memory_space<vmem>>, vector<8x128xf32>,
    return
  }
  func.func @transform_0(%arg0: i32) -> (i32, i32) {
    %c0_i32 = arith.constant 0 : i32
    %c0_i32_0 = arith.constant 0 : i32
    return %arg0, %c0_i32 : i32, i32
  }
  func.func @transform_1(%arg0: i32) -> (i32, i32) {
    %c0_i32 = arith.constant 0 : i32
    %c0_i32_0 = arith.constant 0 : i32
    %c0_i32_1 = arith.constant 0 : i32
    return %c0_i32, %c0_i32_0 : i32, i32
  }
  func.func @transform_2(%arg0: i32) -> (i32, i32) {
    %c0_i32 = arith.constant 0 : i32
    %c0_i32_0 = arith.constant 0 : i32
    %c0_i32_1 = arith.constant 0 : i32
    return %c0_i32, %c0_i32_0 : i32, i32
  }
  func.func @transform_3(%arg0: i32) -> (i32, i32) {
    %c0_i32 = arith.constant 0 : i32
    %c0_i32_0 = arith.constant 0 : i32
    %c0_i32_1 = arith.constant 0 : i32
    return %c0_i32, %c0_i32_0 : i32, i32
  }
  func.func @transform_4(%arg0: i32) -> (i32, i32) {
    %c0_i32 = arith.constant 0 : i32
    %c0_i32_0 = arith.constant 0 : i32
    %c0_i32_1 = arith.constant 0 : i32
    return %c0_i32, %c0_i32_0 : i32, i32
  }
  func.func @transform_5(%arg0: i32) -> (i32, i32) {
    %c0_i32 = arith.constant 0 : i32
    %c0_i32_0 = arith.constant 0 : i32
    return %arg0, %c0_i32 : i32, i32
  }
}

</mosaic_0001>

<llo_original>
// kernel: ava_head_forward.1
$region0: #{ava_head_forward.1}
  #allocation0 [shape = 'u32[]', space=smem, size = 0x4, offset = 0x4, fixed_abs, tag = 'smem constant byte address 0x4 - core index']
  #allocation1 [shape = 'u32[144,128]{1,0:T(1,128)}', space=vmem, size = 0x12000, scoped, tag = 'internal scratch']
  %s0 = inlined_call_operand.hbm [shape: f32[8,32], index: 0, kind: input, shape index: {}]
  %s1 = inlined_call_operand.hbm [shape: bf16[32,128], index: 1, kind: input, shape index: {}]
  %s2 = inlined_call_operand.vmem [shape: f32[1,128], index: 2, kind: input, shape index: {}]
  %s3 = inlined_call_operand.hbm [shape: bf16[128,128], index: 3, kind: input, shape index: {}]
  %s4 = inlined_call_operand.vmem [shape: f32[1,128], index: 4, kind: input, shape index: {}]
  %s5 = inlined_call_operand.hbm [shape: f32[8,128], index: 5, kind: output, shape index: {}]
  %s6 = sld [smem:[#allocation0]]
  $region42: #{ava_head_forward.1} parent=0
    _
  %s8 = ssub.s32 1, %s6
  %s9 = scalar_select 0, %s8, %s6
  $region1: #{ava_head_forward.1} parent=0
    #allocation2 [shape = 'u8[4096]{0}', space=vmem, size = 0x1000, scoped, tag = 'input window, operand 0, single buffered']
    #allocation3 [shape = 's32[1]{0}', space=sflag, size = 0x4, scoped, tag = 'scoped memory for ava_head_forward.1']
    #allocation4 [shape = 's32[1]{0}', space=sflag, size = 0x4, scoped, tag = 'scoped memory for ava_head_forward.1']
    #allocation5 [shape = 'u8[8192]{0}', space=vmem, size = 0x2000, scoped, tag = 'input window, operand 1, single buffered']
    #allocation6 [shape = 's32[1]{0}', space=sflag, size = 0x4, scoped, tag = 'scoped memory for ava_head_forward.1']
    #allocation7 [shape = 'u8[32768]{0}', space=vmem, size = 0x8000, scoped, tag = 'input window, operand 3, single buffered']
    #allocation8 [shape = 'u8[4096]{0}', space=vmem, size = 0x1000, scoped, tag = 'output window, operand 0, single buffered']
    %10 = vsyncpa [#allocation3], 0
    %11 = vsyncpa [#allocation6], 0
    %12 = vsyncpa [#allocation4], 0
    // Predicated region
    $region2: #{ava_head_forward.1} parent=1 // pred_check
      _
    $region3: #{ava_head_forward.1} parent=1 // pred_check_branch
      %14 = sbr.rel (0) target = $region5
    $region4: #{ava_head_forward.1} parent=1 // pred_region
      %s16 = ssub.s32 128, 128
      %17 = vsyncadd [#allocation3], %s16
      %s19 = sshll.u32 [#allocation2], 4
      %s20 = int_to_ptr.vmem [resolvable:$true] %s19
      %22 = dma.hbm_to_vmem [thread:$0]  %s0, 128, %s20, [#allocation3]
    $region5: #{ava_head_forward.1} parent=1 // pred_fallthru
      _
    // Predicated region
    $region6: #{ava_head_forward.1} parent=1 // pred_check
      _
    $region7: #{ava_head_forward.1} parent=1 // pred_check_branch
      %24 = sbr.rel (0) target = $region9
    $region8: #{ava_head_forward.1} parent=1 // pred_region
      %s26 = ssub.s32 256, 256
      %27 = vsyncadd [#allocation6], %s26
      %s28 = sshll.u32 [#allocation5], 4
      %s29 = int_to_ptr.vmem [resolvable:$true] %s28
      %34 = dma.hbm_to_vmem [thread:$0]  %s1, 256, %s29, [#allocation6], 64, 64, 4
    $region9: #{ava_head_forward.1} parent=1 // pred_fallthru
      _
    // Predicated region
    $region10: #{ava_head_forward.1} parent=1 // pred_check
      _
    $region11: #{ava_head_forward.1} parent=1 // pred_check_branch
      %36 = sbr.rel (0) target = $region13
    $region12: #{ava_head_forward.1} parent=1 // pred_region
      _
    $region13: #{ava_head_forward.1} parent=1 // pred_fallthru
      _
    // Predicated region
    $region14: #{ava_head_forward.1} parent=1 // pred_check
      _
    $region15: #{ava_head_forward.1} parent=1 // pred_check_branch
      %38 = sbr.rel (0) target = $region17
    $region16: #{ava_head_forward.1} parent=1 // pred_region
      %s40 = ssub.s32 1024, 1024
      %41 = vsyncadd [#allocation6], %s40
      %s42 = sshll.u32 [#allocation7], 4
      %s43 = int_to_ptr.vmem [resolvable:$true] %s42
      %48 = dma.hbm_to_vmem [thread:$0]  %s3, 1024, %s43, [#allocation6], 64, 64, 4
    $region17: #{ava_head_forward.1} parent=1 // pred_fallthru
      _
    // Predicated region
    $region18: #{ava_head_forward.1} parent=1 // pred_check
      _
    $region19: #{ava_head_forward.1} parent=1 // pred_check_branch
      %50 = sbr.rel (0) target = $region21
    $region20: #{ava_head_forward.1} parent=1 // pred_region
      _
    $region21: #{ava_head_forward.1} parent=1 // pred_fallthru
      _
    // Predicated region
    $region22: #{ava_head_forward.1} parent=1 // pred_check
      _
    $region23: #{ava_head_forward.1} parent=1 // pred_check_branch
      %52 = sbr.rel (0) target = $region25
    $region24: #{ava_head_forward.1} parent=1 // pred_region
      %53 = dma.done [#allocation3], 128
    $region25: #{ava_head_forward.1} parent=1 // pred_fallthru
      _
    // Predicated region
    $region26: #{ava_head_forward.1} parent=1 // pred_check
      _
    $region27: #{ava_head_forward.1} parent=1 // pred_check_branch
      %55 = sbr.rel (0) target = $region29
    $region28: #{ava_head_forward.1} parent=1 // pred_region
      %56 = dma.done [#allocation6], 256
    $region29: #{ava_head_forward.1} parent=1 // pred_fallthru
      _
    // Predicated region
    $region30: #{ava_head_forward.1} parent=1 // pred_check
      _
    $region31: #{ava_head_forward.1} parent=1 // pred_check_branch
      %58 = sbr.rel (0) target = $region33
    $region32: #{ava_head_forward.1} parent=1 // pred_region
      %59 = dma.done [#allocation6], 1024
    $region33: #{ava_head_forward.1} parent=1 // pred_fallthru
      _
    %v61 = vld [vmem:[#allocation2] sm:$0xff]
    %v62 = vpack.c.bf16 %v61, %v61
    %v63 = vld [vmem:[#allocation5] sm:$0xf]
    %v64 = vld [vmem:[#allocation5 + $0x4] sm:$0xf]
    %v65 = vld [vmem:[#allocation5 + $0x8] sm:$0xf]
    %v66 = vld [vmem:[#allocation5 + $0xc] sm:$0xf]
    %v67 = vld [vmem:[%s2] sm:$0x1]
    %v69 = vlaneseq
    %v70 = vshrl.u32 %v69, 7
    %v71 = vsub.s32 0, %v70
    %v72 = vrot.slane %v67, %v71
    %v78 = vunpack.c.l.b16 %v63
    %v79 = vunpack.c.l.b16 %v64
    %v80 = vunpack.c.l.b16 %v65
    %v81 = vunpack.c.l.b16 %v66
    %v82 = vpack.c.b16 %v79, %v78
    %v83 = vpack.c.b16 %v81, %v80
    %vm86 = vcmask 261120
    %v88 = vsel %vm86, %v62, 0
    %90 = vmatprep.subr.bf16.mxu0 0
    %91 = vmatpush1.bf16.msra.mxu0 %v82
    %92 = vmatprep.subr.bf16.mxu0 0
    %93 = vmatpush1.bf16.msra.mxu0 %v83
    %94 = vmatprep.subr.bf16.mxu0 0
    %95 = vmatpush1.bf16.msra.mxu0 0
    %96 = vmatprep.subr.bf16.mxu0 0
    %97 = vmatpush1.bf16.msra.mxu0 0
    %98 = vmatprep.subr.bf16.mxu0 0
    %99 = vmatpush1.bf16.msra.mxu0 0
    %100 = vmatprep.subr.bf16.mxu0 0
    %101 = vmatpush1.bf16.msra.mxu0 0
    %102 = vmatprep.subr.bf16.mxu0 0
    %103 = vmatpush1.bf16.msra.mxu0 0
    %104 = vmatprep.subr.bf16.mxu0 0
    %105 = vmatpush1.bf16.msra.mxu0 0
    %106 = vmatprep.subr.bf16.mxu0 0
    %107 = vmatpush1.bf16.msra.mxu0 0
    %108 = vmatprep.subr.bf16.mxu0 0
    %109 = vmatpush1.bf16.msra.mxu0 0
    %110 = vmatprep.subr.bf16.mxu0 0
    %111 = vmatpush1.bf16.msra.mxu0 0
    %112 = vmatprep.subr.bf16.mxu0 0
    %113 = vmatpush1.bf16.msra.mxu0 0
    %114 = vmatprep.subr.bf16.mxu0 0
    %115 = vmatpush1.bf16.msra.mxu0 0
    %116 = vmatprep.subr.bf16.mxu0 0
    %117 = vmatpush1.bf16.msra.mxu0 0
    %118 = vmatprep.subr.bf16.mxu0 0
    %119 = vmatpush1.bf16.msra.mxu0 0
    %120 = vmatprep.subr.bf16.mxu0 0
    %121 = vmatpush1.bf16.msra.mxu0 0
    %122 = vmatprep.mubr.bf16.mxu0 0
    %123 = vmatmul.mubr.bf16.gmra.mrb[0].mxu0 %v88
    %v124 = vpop.f32.mrb[0].mxu0
    %v125 = vadd.f32 %v72, %v124
    %v126 = vpop.f32.mrb[0].mxu0
    %v127 = vpop.f32.mrb[0].mxu0
    %v128 = vpop.f32.mrb[0].mxu0
    %129 = vdwg.mxu0
    %vm130 = vcmp.ge.f32.partialorder %v125, 0.0
    %v131 = vmul.f32 %v125, 0.01
    %v132 = vsel %vm130, %v125, %v131
    %v133 = vpack.c.bf16 %v132, %v132
    %v134 = vld [vmem:[#allocation7] sm:$0xf]
    %v135 = vld [vmem:[#allocation7 + $0x4] sm:$0xf]
    %v136 = vld [vmem:[#allocation7 + $0x8] sm:$0xf]
    %v137 = vld [vmem:[#allocation7 + $0xc] sm:$0xf]
    %v138 = vld [vmem:[#allocation7 + $0x10] sm:$0xf]
    %v139 = vld [vmem:[#allocation7 + $0x14] sm:$0xf]
    %v140 = vld [vmem:[#allocation7 + $0x18] sm:$0xf]
    %v141 = vld [vmem:[#allocation7 + $0x1c] sm:$0xf]
    %v142 = vld [vmem:[#allocation7 + $0x20] sm:$0xf]
    %v143 = vld [vmem:[#allocation7 + $0x24] sm:$0xf]
    %v144 = vld [vmem:[#allocation7 + $0x28] sm:$0xf]
    %v145 = vld [vmem:[#allocation7 + $0x2c] sm:$0xf]
    %v146 = vld [vmem:[#allocation7 + $0x30] sm:$0xf]
    %v147 = vld [vmem:[#allocation7 + $0x34] sm:$0xf]
    %v148 = vld [vmem:[#allocation7 + $0x38] sm:$0xf]
    %v149 = vld [vmem:[#allocation7 + $0x3c] sm:$0xf]
    %v150 = vld [vmem:[%s4] sm:$0x1]
    %v152 = vlaneseq
    %v153 = vshrl.u32 %v152, 7
    %v154 = vsub.s32 0, %v153
    %v155 = vrot.slane %v150, %v154
    %v173 = vunpack.c.l.b16 %v134
    %v174 = vunpack.c.l.b16 %v135
    %v175 = vunpack.c.l.b16 %v136
    %v176 = vunpack.c.l.b16 %v137
    %v177 = vunpack.c.l.b16 %v138
    %v178 = vunpack.c.l.b16 %v139
    %v179 = vunpack.c.l.b16 %v140
    %v180 = vunpack.c.l.b16 %v141
    %v181 = vunpack.c.l.b16 %v142
    %v182 = vunpack.c.l.b16 %v143
    %v183 = vunpack.c.l.b16 %v144
    %v184 = vunpack.c.l.b16 %v145
    %v185 = vunpack.c.l.b16 %v146
    %v186 = vunpack.c.l.b16 %v147
    %v187 = vunpack.c.l.b16 %v148
    %v188 = vunpack.c.l.b16 %v149
    %v189 = vpack.c.b16 %v174, %v173
    %v190 = vpack.c.b16 %v176, %v175
    %v191 = vpack.c.b16 %v178, %v177
    %v192 = vpack.c.b16 %v180, %v179
    %v193 = vpack.c.b16 %v182, %v181
    %v194 = vpack.c.b16 %v184, %v183
    %v195 = vpack.c.b16 %v186, %v185
    %v196 = vpack.c.b16 %v188, %v187
    %205 = vmatprep.subr.bf16.mxu0 0
    %206 = vmatpush1.bf16.msra.mxu0 %v189
    %207 = vmatprep.subr.bf16.mxu0 0
    %208 = vmatpush1.bf16.msra.mxu0 %v190
    %209 = vmatprep.subr.bf16.mxu0 0
    %210 = vmatpush1.bf16.msra.mxu0 %v191
    %211 = vmatprep.subr.bf16.mxu0 0
    %212 = vmatpush1.bf16.msra.mxu0 %v192
    %213 = vmatprep.subr.bf16.mxu0 0
    %214 = vmatpush1.bf16.msra.mxu0 %v193
    %215 = vmatprep.subr.bf16.mxu0 0
    %216 = vmatpush1.bf16.msra.mxu0 %v194
    %217 = vmatprep.subr.bf16.mxu0 0
    %218 = vmatpush1.bf16.msra.mxu0 %v195
    %219 = vmatprep.subr.bf16.mxu0 0
    %220 = vmatpush1.bf16.msra.mxu0 %v196
    %221 = vmatprep.subr.bf16.mxu0 0
    %222 = vmatpush1.bf16.msra.mxu0 0
    %223 = vmatprep.subr.bf16.mxu0 0
    %224 = vmatpush1.bf16.msra.mxu0 0
    %225 = vmatprep.subr.bf16.mxu0 0
    %226 = vmatpush1.bf16.msra.mxu0 0
    %227 = vmatprep.subr.bf16.mxu0 0
    %228 = vmatpush1.bf16.msra.mxu0 0
    %229 = vmatprep.subr.bf16.mxu0 0
    %230 = vmatpush1.bf16.msra.mxu0 0
    %231 = vmatprep.subr.bf16.mxu0 0
    %232 = vmatpush1.bf16.msra.mxu0 0
    %233 = vmatprep.subr.bf16.mxu0 0
    %234 = vmatpush1.bf16.msra.mxu0 0
    %235 = vmatprep.subr.bf16.mxu0 0
    %236 = vmatpush1.bf16.msra.mxu0 0
    %237 = vmatprep.mubr.bf16.mxu0 0
    %238 = vmatmul.mubr.bf16.gmra.mrb[0].mxu0 %v133
    %v239 = vpop.f32.mrb[0].mxu0
    %v240 = vadd.f32 %v155, %v239
    %v241 = vpop.f32.mrb[0].mxu0
    %v242 = vpop.f32.mrb[0].mxu0
    %v243 = vpop.f32.mrb[0].mxu0
    %244 = vdwg.mxu0
    %245 = vst [vmem:[#allocation8] sm:$0xff] %v240
    // Predicated region
    $region34: #{ava_head_forward.1} parent=1 // pred_check
      _
    $region35: #{ava_head_forward.1} parent=1 // pred_check_branch
      %247 = sbr.rel (0) target = $region37
    $region36: #{ava_head_forward.1} parent=1 // pred_region
      %s249 = ssub.s32 128, 128
      %250 = vsyncadd [#allocation4], %s249
      %s252 = sshll.u32 [#allocation8], 4
      %s253 = int_to_ptr.vmem [resolvable:$true] %s252
      %255 = dma.vmem_to_hbm [thread:$0]  %s253, 128, %s5, [#allocation4]
    $region37: #{ava_head_forward.1} parent=1 // pred_fallthru
      _
    // Predicated region
    $region38: #{ava_head_forward.1} parent=1 // pred_check
      _
    $region39: #{ava_head_forward.1} parent=1 // pred_check_branch
      %257 = sbr.rel (0) target = $region41
    $region40: #{ava_head_forward.1} parent=1 // pred_region
      %258 = dma.done [#allocation4], 128
    $region41: #{ava_head_forward.1} parent=1 // pred_fallthru
      _
    %259 = vsyncpa [#allocation3], 1
    %260 = vsyncpa [#allocation6], 1
    %261 = vsyncpa [#allocation4], 1

</llo_original>
